<compile_context>
chip_gen: v6e
topology: v6e:2x2x1
jax: 0.10.0
libtpu: 0.0.40
codegen_flags: <defaults>
</compile_context>

<pallas_src>
import functools

import jax
import jax.numpy as jnp
from jax.experimental import pallas as pl
from jax.experimental.pallas import tpu as pltpu


def _prenorm_attention_kernel(
    x_ref, gamma_ref, beta_ref, wqkv_ref, wout_ref, o_ref,
    *, heads, dim_head, eps,
):
    """Fused PreNorm + multi-head self-attention for one batch element.

    x_ref    : (1, N, D)        VMEM  f32
    gamma_ref: (1, D)           VMEM  f32   LayerNorm weight
    beta_ref : (1, D)           VMEM  f32   LayerNorm bias
    wqkv_ref : (D, 3*H*Dh)      VMEM  bf16  fused QKV weight (scale folded into q cols)
    wout_ref : (H*Dh, D)        VMEM  bf16  output projection weight
    o_ref    : (1, N, D)        VMEM
    """
    n = x_ref.shape[1]
    inner = heads * dim_head

    x = x_ref[0].astype(jnp.float32)                          # (N, D)

    # ---- LayerNorm over the feature axis (f32 statistics) -----------------
    mean = jnp.mean(x, axis=-1, keepdims=True)
    xc = x - mean
    var = jnp.mean(xc * xc, axis=-1, keepdims=True)
    xn = xc * jax.lax.rsqrt(var + eps)
    xn = xn * gamma_ref[...] + beta_ref[...]                  # (N, D) f32

    # ---- Fused, lane-dense QKV projection ----------------------------------
    # One (N, D) @ (D, 3*inner) MXU matmul, bf16 operands, f32 accumulation.
    # The softmax scale is already folded into the q columns of the weight.
    qkv = jnp.dot(xn.astype(wqkv_ref.dtype), wqkv_ref[...],
                  preferred_element_type=jnp.float32)         # (N, 3*inner) f32

    # Head-major layout with a single relayout (columns are ordered
    # [q(h d) | k(h d) | v(h d)], i.e. already head-major inside each third).
    qkvh = qkv.reshape(n, 3 * heads, dim_head)                # (N, 3H, Dh)
    qkvh = jnp.transpose(qkvh, (1, 0, 2)).astype(jnp.bfloat16)  # (3H, N, Dh)
    q = qkvh[:heads]                                          # (H, N, Dh)
    k = qkvh[heads:2 * heads]                                 # (H, N, Dh)
    v = qkvh[2 * heads:]                                      # (H, N, Dh)

    # ---- Scaled dot-product softmax attention (softmax math in f32) -------
    dots = jnp.einsum("hnd,hmd->hnm", q, k,
                      preferred_element_type=jnp.float32)     # (H, N, N)
    m = jnp.max(dots, axis=-1, keepdims=True)
    p = jnp.exp(dots - m)                                     # (H, N, N) f32
    denom = jnp.sum(p, axis=-1, keepdims=True)                # (H, N, 1)

    # Un-normalized PV matmul, then normalize the (much smaller) context.
    ctx = jnp.einsum("hnm,hmd->hnd", p.astype(jnp.bfloat16), v,
                     preferred_element_type=jnp.float32)      # (H, N, Dh)
    ctx = ctx * pl.reciprocal(denom)                          # exact reciprocal

    # ---- Output projection fused with the head sum -------------------------
    # (N, inner) @ (inner, D): full contraction depth, no (H,N,D) intermediate.
    ctx2 = jnp.transpose(ctx, (1, 0, 2)).reshape(n, inner)    # (N, inner)
    out = jnp.dot(ctx2.astype(wout_ref.dtype), wout_ref[...],
                  preferred_element_type=jnp.float32)         # (N, D)
    o_ref[0] = out.astype(o_ref.dtype)


def prenorm_attention_forward(x, ln_gamma, ln_beta, w_qkv, w_out, *,
                              heads, dim_head, eps=1e-5):
    """PreNorm(Attention) forward.

    x        : (B, N, D) float32
    ln_gamma : (D,)  LayerNorm weight        ln_beta : (D,)  LayerNorm bias
    w_qkv    : (D, 3*H*Dh)  == to_qkv.weight.T, columns [q(h d)|k(h d)|v(h d)]
    w_out    : (H*Dh, D)    == to_out Linear weight.T
    """
    B, N, D = x.shape
    inner = heads * dim_head
    assert w_qkv.shape == (D, 3 * inner)
    assert w_out.shape == (inner, D)
    scale = float(dim_head) ** (-0.5)

    # Trace-time weight prep: fold the softmax scale into the q columns and
    # pre-cast the MXU weights to bf16 (halves weight DMA bytes / VMEM).
    col_scale = jnp.concatenate(
        [jnp.full((inner,), scale, jnp.float32),
         jnp.ones((2 * inner,), jnp.float32)], axis=0)
    w_qkv_b = (w_qkv.astype(jnp.float32) * col_scale[None, :]).astype(jnp.bfloat16)
    w_out_b = w_out.astype(jnp.bfloat16)
    gamma = ln_gamma.reshape(1, D).astype(jnp.float32)
    beta = ln_beta.reshape(1, D).astype(jnp.float32)

    kernel = functools.partial(
        _prenorm_attention_kernel, heads=heads, dim_head=dim_head, eps=eps)

    return pl.pallas_call(
        kernel,
        out_shape=jax.ShapeDtypeStruct((B, N, D), x.dtype),
        grid_spec=pltpu.PrefetchScalarGridSpec(
            num_scalar_prefetch=0,
            grid=(B,),
            in_specs=[
                pl.BlockSpec((1, N, D), lambda b: (b, 0, 0)),
                pl.BlockSpec((1, D), lambda b: (0, 0)),
                pl.BlockSpec((1, D), lambda b: (0, 0)),
                pl.BlockSpec((D, 3 * inner), lambda b: (0, 0)),
                pl.BlockSpec((inner, D), lambda b: (0, 0)),
            ],
            out_specs=pl.BlockSpec((1, N, D), lambda b: (b, 0, 0)),
        ),
        compiler_params=pltpu.CompilerParams(
            dimension_semantics=("parallel",),
            # Raises the v5e default (16 MiB); raise further for ViT-scale N/D.
            vmem_limit_bytes=32 * 1024 * 1024,
        ),
    )(x, gamma, beta, w_qkv_b, w_out_b)


def reference_forward(x, ln_gamma, ln_beta, w_qkv, w_out, *,
                      heads, dim_head, eps=1e-5):
    """Pure-JAX reference mirroring PyTorch PreNorm(Attention) (mask=None, eval)."""
    B, N, D = x.shape
    inner = heads * dim_head
    scale = float(dim_head) ** (-0.5)

    # LayerNorm (PyTorch semantics: biased variance).
    mean = jnp.mean(x, axis=-1, keepdims=True)
    var = jnp.mean((x - mean) ** 2, axis=-1, keepdims=True)
    xn = (x - mean) / jnp.sqrt(var + eps) * ln_gamma + ln_beta

    qkv = xn @ w_qkv                                          # (B, N, 3*inner)
    q, k, v = jnp.split(qkv, 3, axis=-1)

    def to_heads(t):  # 'b n (h d) -> b h n d'
        return t.reshape(B, N, heads, dim_head).transpose(0, 2, 1, 3)

    q, k, v = map(to_heads, (q, k, v))
    dots = jnp.einsum("bhid,bhjd->bhij", q, k) * scale
    attn = jax.nn.softmax(dots, axis=-1)
    out = jnp.einsum("bhij,bhjd->bhid", attn, v)
    out = out.transpose(0, 2, 1, 3).reshape(B, N, inner)      # 'b h n d -> b n (h d)'
    return out @ w_out


if __name__ == "__main__":
    B, N, DIM = 2, 8, 32
    HEADS, DIM_HEAD = 4, 8
    INNER = HEADS * DIM_HEAD

    key = jax.random.PRNGKey(0)
    kx, kg, kb, kqkv, kout = jax.random.split(key, 5)

    x = jax.random.normal(kx, (B, N, DIM), dtype=jnp.float32)
    ln_gamma = 1.0 + 0.1 * jax.random.normal(kg, (DIM,), dtype=jnp.float32)
    ln_beta = 0.1 * jax.random.normal(kb, (DIM,), dtype=jnp.float32)
    w_qkv = jax.random.normal(kqkv, (DIM, 3 * INNER), dtype=jnp.float32) * 0.05
    w_out = jax.random.normal(kout, (INNER, DIM), dtype=jnp.float32) * 0.05

    out = prenorm_attention_forward(
        x, ln_gamma, ln_beta, w_qkv, w_out, heads=HEADS, dim_head=DIM_HEAD)
    out = jax.block_until_ready(out)

    ref = reference_forward(
        x, ln_gamma, ln_beta, w_qkv, w_out, heads=HEADS, dim_head=DIM_HEAD)
    assert out.shape == (B, N, DIM)
    # Tolerance covers bf16 MXU operands (all accumulation / softmax math is
    # f32 and the softmax reciprocal is exact).
    assert jnp.allclose(out, ref, atol=1e-2, rtol=1e-2), "mismatch vs reference"

    print("KERNEL_OK")
</pallas_src>

<mosaic_0001>
module attributes {stable_mosaic.version = 11 : i64} {
  func.func @_prenorm_attention_kernel(%arg0: i32, %arg1: memref<1x8x32xf32, #tpu.memory_space<vmem>>, %arg2: memref<1x32xf32, #tpu.memory_space<vmem>>, %arg3: memref<1x32xf32, #tpu.memory_space<vmem>>, %arg4: memref<32x96xbf16, #tpu.memory_space<vmem>>, %arg5: memref<32x32xbf16, #tpu.memory_space<vmem>>, %arg6: memref<1x8x32xf32, #tpu.memory_space<vmem>>) attributes {dimension_semantics = [#tpu.dimension_semantics<parallel>], iteration_bounds = array<i64: 2>, scalar_prefetch = 0 : i64, scratch_operands = 0 : i64, tpu.core_type = #tpu.core_type<tc>, window_params = [{transform_indices = @transform_0, window_bounds = array<i64: 1, 8, 32>}, {pipeline_mode = #tpu.pipeline_mode<synchronous>, transform_indices = @transform_1, window_bounds = array<i64: 1, 32>}, {pipeline_mode = #tpu.pipeline_mode<synchronous>, transform_indices = @transform_2, window_bounds = array<i64: 1, 32>}, {pipeline_mode = #tpu.pipeline_mode<synchronous>, transform_indices = @transform_3, window_bounds = array<i64: 32, 96>}, {pipeline_mode = #tpu.pipeline_mode<synchronous>, transform_indices = @transform_4, window_bounds = array<i64: 32, 32>}, {transform_indices = @transform_5, window_bounds = array<i64: 1, 8, 32>}]} {
    %c0 = arith.constant 0 : index
    %c0_0 = arith.constant 0 : index
    %c0_1 = arith.constant 0 : index
    %0 = vector.load %arg1[%c0, %c0_0, %c0_1] : memref<1x8x32xf32, #tpu.memory_space<vmem>>, vector<1x8x32xf32>
    %1 = vector.shape_cast %0 : vector<1x8x32xf32> to vector<8x32xf32>
    %cst = arith.constant dense<0.000000e+00> : vector<8xf32>
    %2 = vector.multi_reduction <add>, %1, %cst [1] : vector<8x32xf32> to vector<8xf32>
    %3 = vector.shape_cast %2 : vector<8xf32> to vector<8x1xf32>
    %cst_2 = arith.constant 3.200000e+01 : f32
    %4 = vector.broadcast %cst_2 : f32 to vector<8x1xf32>
    %5 = arith.divf %3, %4 : vector<8x1xf32>
    %6 = vector.broadcast %5 : vector<8x1xf32> to vector<8x32xf32>
    %7 = arith.subf %1, %6 : vector<8x32xf32>
    %8 = arith.mulf %7, %7 : vector<8x32xf32>
    %cst_3 = arith.constant dense<0.000000e+00> : vector<8xf32>
    %9 = vector.multi_reduction <add>, %8, %cst_3 [1] : vector<8x32xf32> to vector<8xf32>
    %10 = vector.shape_cast %9 : vector<8xf32> to vector<8x1xf32>
    %cst_4 = arith.constant 3.200000e+01 : f32
    %11 = vector.broadcast %cst_4 : f32 to vector<8x1xf32>
    %12 = arith.divf %10, %11 : vector<8x1xf32>
    %cst_5 = arith.constant 9.99999974E-6 : f32
    %13 = vector.broadcast %cst_5 : f32 to vector<8x1xf32>
    %14 = arith.addf %12, %13 : vector<8x1xf32>
    %15 = math.rsqrt %14 : vector<8x1xf32>
    %16 = vector.broadcast %15 : vector<8x1xf32> to vector<8x32xf32>
    %17 = arith.mulf %7, %16 : vector<8x32xf32>
    %c0_6 = arith.constant 0 : index
    %c0_7 = arith.constant 0 : index
    %18 = vector.load %arg2[%c0_6, %c0_7] : memref<1x32xf32, #tpu.memory_space<vmem>>, vector<1x32xf32>
    %19 = vector.broadcast %18 : vector<1x32xf32> to vector<8x32xf32>
    %20 = arith.mulf %17, %19 : vector<8x32xf32>
    %c0_8 = arith.constant 0 : index
    %c0_9 = arith.constant 0 : index
    %21 = vector.load %arg3[%c0_8, %c0_9] : memref<1x32xf32, #tpu.memory_space<vmem>>, vector<1x32xf32>
    %22 = vector.broadcast %21 : vector<1x32xf32> to vector<8x32xf32>
    %23 = arith.addf %20, %22 : vector<8x32xf32>
    %24 = arith.truncf %23 : vector<8x32xf32> to vector<8x32xbf16>
    %c0_10 = arith.constant 0 : index
    %c0_11 = arith.constant 0 : index
    %25 = vector.load %arg4[%c0_10, %c0_11] : memref<32x96xbf16, #tpu.memory_space<vmem>>, vector<32x96xbf16>
    %cst_12 = arith.constant dense<0.000000e+00> : vector<8x96xf32>
    %26 = tpu.matmul %24, %25, %cst_12 {dimension_numbers = #tpu.dot_dimension_numbers<[1], [0], [0], [1], [0, 0, 1, 1], [], []>} : vector<8x32xbf16>, vector<32x96xbf16>, vector<8x96xf32> -> vector<8x96xf32>
    %27 = vector.shape_cast %26 : vector<8x96xf32> to vector<8x12x8xf32>
    %28 = tpu.transpose %27, [1, 0, 2] : vector<8x12x8xf32> -> vector<12x8x8xf32>
    %29 = arith.truncf %28 : vector<12x8x8xf32> to vector<12x8x8xbf16>
    %30 = vector.extract_strided_slice %29 {offsets = [0, 0, 0], sizes = [4, 8, 8], strides = [1, 1, 1]} : vector<12x8x8xbf16> to vector<4x8x8xbf16>
    %31 = vector.extract_strided_slice %29 {offsets = [4, 0, 0], sizes = [4, 8, 8], strides = [1, 1, 1]} : vector<12x8x8xbf16> to vector<4x8x8xbf16>
    %32 = vector.extract_strided_slice %29 {offsets = [8, 0, 0], sizes = [4, 8, 8], strides = [1, 1, 1]} : vector<12x8x8xbf16> to vector<4x8x8xbf16>
    "tpu.trace_start"() <{level = 10 : i32, message = "hnd,hmd->hnm"}> : () -> ()
    %cst_13 = arith.constant dense<0.000000e+00> : vector<4x8x8xf32>
    %33 = tpu.matmul %30, %31, %cst_13 {dimension_numbers = #tpu.dot_dimension_numbers<[2], [2], [1], [1], [0, 0, 0, 1, 1, 1], [0], [0]>} : vector<4x8x8xbf16>, vector<4x8x8xbf16>, vector<4x8x8xf32> -> vector<4x8x8xf32>
    "tpu.trace_stop"() : () -> ()
    %cst_14 = arith.constant dense<0xFF800000> : vector<4x8xf32>
    %34 = vector.multi_reduction <maximumf>, %33, %cst_14 [2] : vector<4x8x8xf32> to vector<4x8xf32>
    %35 = vector.shape_cast %34 : vector<4x8xf32> to vector<4x8x1xf32>
    %36 = vector.broadcast %35 : vector<4x8x1xf32> to vector<4x8x8xf32>
    %37 = arith.subf %33, %36 : vector<4x8x8xf32>
    %38 = math.exp %37 : vector<4x8x8xf32>
    %cst_15 = arith.constant dense<0.000000e+00> : vector<4x8xf32>
    %39 = vector.multi_reduction <add>, %38, %cst_15 [2] : vector<4x8x8xf32> to vector<4x8xf32>
    %40 = vector.shape_cast %39 : vector<4x8xf32> to vector<4x8x1xf32>
    %41 = arith.truncf %38 : vector<4x8x8xf32> to vector<4x8x8xbf16>
    "tpu.trace_start"() <{level = 10 : i32, message = "hnm,hmd->hnd"}> : () -> ()
    %cst_16 = arith.constant dense<0.000000e+00> : vector<4x8x8xf32>
    %42 = tpu.matmul %41, %32, %cst_16 {dimension_numbers = #tpu.dot_dimension_numbers<[2], [1], [1], [2], [0, 0, 0, 1, 1, 2], [0], [0]>} : vector<4x8x8xbf16>, vector<4x8x8xbf16>, vector<4x8x8xf32> -> vector<4x8x8xf32>
    "tpu.trace_stop"() : () -> ()
    %43 = tpu.reciprocal %40 : vector<4x8x1xf32> -> vector<4x8x1xf32>
    %44 = vector.broadcast %43 : vector<4x8x1xf32> to vector<4x8x8xf32>
    %45 = arith.mulf %42, %44 : vector<4x8x8xf32>
    %46 = tpu.transpose %45, [1, 0, 2] : vector<4x8x8xf32> -> vector<8x4x8xf32>
    %47 = vector.shape_cast %46 : vector<8x4x8xf32> to vector<8x32xf32>
    %48 = arith.truncf %47 : vector<8x32xf32> to vector<8x32xbf16>
    %c0_17 = arith.constant 0 : index
    %c0_18 = arith.constant 0 : index
    %49 = vector.load %arg5[%c0_17, %c0_18] : memref<32x32xbf16, #tpu.memory_space<vmem>>, vector<32x32xbf16>
    %cst_19 = arith.constant dense<0.000000e+00> : vector<8x32xf32>
    %50 = tpu.matmul %48, %49, %cst_19 {dimension_numbers = #tpu.dot_dimension_numbers<[1], [0], [0], [1], [0, 0, 1, 1], [], []>} : vector<8x32xbf16>, vector<32x32xbf16>, vector<8x32xf32> -> vector<8x32xf32>
    %c0_20 = arith.constant 0 : index
    %c0_21 = arith.constant 0 : index
    %c0_22 = arith.constant 0 : index
    %51 = vector.load %arg6[%c0_20, %c0_21, %c0_22] : memref<1x8x32xf32, #tpu.memory_space<vmem>>, vector<1x8x32xf32>
    %52 = vector.shape_cast %51 : vector<1x8x32xf32> to vector<8x32xf32>
    %53 = vector.shape_cast %50 : vector<8x32xf32> to vector<1x8x32xf32>
    tpu.vector_store %arg6[%c0_20, %c0_21, %c0_22], %53 {strides = array<i32>} : memref<1x8x32xf32, #tpu.memory_space<vmem>>, vector<1x8x32xf32>,
    return
  }
  func.func @transform_0(%arg0: i32) -> (i32, i32, i32) {
    %c0_i32 = arith.constant 0 : i32
    %c0_i32_0 = arith.constant 0 : i32
    %c0_i32_1 = arith.constant 0 : i32
    return %arg0, %c0_i32, %c0_i32_0 : i32, i32, i32
  }
  func.func @transform_1(%arg0: i32) -> (i32, i32) {
    %c0_i32 = arith.constant 0 : i32
    %c0_i32_0 = arith.constant 0 : i32
    %c0_i32_1 = arith.constant 0 : i32
    return %c0_i32, %c0_i32_0 : i32, i32
  }
  func.func @transform_2(%arg0: i32) -> (i32, i32) {
    %c0_i32 = arith.constant 0 : i32
    %c0_i32_0 = arith.constant 0 : i32
    %c0_i32_1 = arith.constant 0 : i32
    return %c0_i32, %c0_i32_0 : i32, i32
  }
  func.func @transform_3(%arg0: i32) -> (i32, i32) {
    %c0_i32 = arith.constant 0 : i32
    %c0_i32_0 = arith.constant 0 : i32
    %c0_i32_1 = arith.constant 0 : i32
    return %c0_i32, %c0_i32_0 : i32, i32
  }
  func.func @transform_4(%arg0: i32) -> (i32, i32) {
    %c0_i32 = arith.constant 0 : i32
    %c0_i32_0 = arith.constant 0 : i32
    %c0_i32_1 = arith.constant 0 : i32
    return %c0_i32, %c0_i32_0 : i32, i32
  }
  func.func @transform_5(%arg0: i32) -> (i32, i32, i32) {
    %c0_i32 = arith.constant 0 : i32
    %c0_i32_0 = arith.constant 0 : i32
    %c0_i32_1 = arith.constant 0 : i32
    return %arg0, %c0_i32, %c0_i32_0 : i32, i32, i32
  }
}

</mosaic_0001>

<llo_original>
// kernel: tpu_custom_call.1
$region0: #{tpu_custom_call.1}
  #allocation0 [shape = 'u32[]', space=smem, size = 0x4, offset = 0x4, fixed_abs, tag = 'smem constant byte address 0x4 - core index']
  #allocation1 [shape = 'u32[144,128]{1,0:T(1,128)}', space=vmem, size = 0x12000, scoped, tag = 'internal scratch']
  %s0 = inlined_call_operand.hbm [shape: f32[2,8,32], index: 0, kind: input, shape index: {}]
  %s1 = inlined_call_operand.vmem [shape: f32[1,32], index: 1, kind: input, shape index: {}]
  %s2 = inlined_call_operand.vmem [shape: f32[1,32], index: 2, kind: input, shape index: {}]
  %s3 = inlined_call_operand.hbm [shape: bf16[32,96], index: 3, kind: input, shape index: {}]
  %s4 = inlined_call_operand.hbm [shape: bf16[32,32], index: 4, kind: input, shape index: {}]
  %s5 = inlined_call_operand.hbm [shape: f32[2,8,32], index: 5, kind: output, shape index: {}]
  %s6 = sld [smem:[#allocation0]]
  $region65: #{tpu_custom_call.1} parent=0
    _
  %s8 = ssub.s32 1, %s6
  %s9 = scalar_select 0, %s8, %s6
  $region1: #{tpu_custom_call.1} parent=0
    #allocation2 [shape = 'u8[8192]{0}', space=vmem, size = 0x2000, scoped, tag = 'input window, operand 0']
    #allocation3 [shape = 's32[2]{0}', space=sflag, size = 0x8, scoped, tag = 'scoped memory for tpu_custom_call.1']
    #allocation4 [shape = 's32[2]{0}', space=sflag, size = 0x8, scoped, tag = 'scoped memory for tpu_custom_call.1']
    #allocation5 [shape = 'u8[8192]{0}', space=vmem, size = 0x2000, scoped, tag = 'input window, operand 3, single buffered']
    #allocation6 [shape = 's32[1]{0}', space=sflag, size = 0x4, scoped, tag = 'scoped memory for tpu_custom_call.1']
    #allocation7 [shape = 'u8[8192]{0}', space=vmem, size = 0x2000, scoped, tag = 'input window, operand 4, single buffered']
    #allocation8 [shape = 'u8[8192]{0}', space=vmem, size = 0x2000, scoped, tag = 'output window, operand 0']
    %10 = vsyncpa [#allocation3], 0
    %s11 = scalar_lea.sflag [#allocation3], 1
    %12 = vsyncpa %s11, 0
    %13 = vsyncpa [#allocation6], 0
    %14 = vsyncpa [#allocation4], 0
    %s15 = scalar_lea.sflag [#allocation4], 1
    %16 = vsyncpa %s15, 0
    loop: start=0, step=1, limit=4
    $region2: #{tpu_custom_call.1} parent=1 // loop_pre_header
      _
    $region3: #{tpu_custom_call.1} parent=1 // loop_header
      %s18 = sphi 0, %s22
      %p19 = scmp.ge.s32.totalorder %s18, 4
      %s28 = sphi 0, %s30
      %s31 = sphi 0, %s28
      %s32 = sphi 0, %s31
      %s48 = sphi 0, %s32
      %s52 = sphi 0, %s52
      %s54 = sphi 0, %s52
      %s55 = sphi 0, %s54
      %s69 = sphi 0, %s55
      %s73 = sphi 0, %s73
      %s75 = sphi 0, %s73
      %s76 = sphi 0, %s75
      %s90 = sphi 0, %s76
      %s94 = sphi 0, %s94
      %s96 = sphi 0, %s94
      %s97 = sphi 0, %s96
      %s111 = sphi 0, %s97
      %s115 = sphi 0, %s115
      %s117 = sphi 0, %s115
      %s118 = sphi 0, %s117
      %s132 = sphi 0, %s118
      %s138 = sphi 0, %s140
      %s141 = sphi 0, %s138
      %s142 = sphi 0, %s141
      %s158 = sphi 0, %s142
    $region4: #{tpu_custom_call.1} parent=1 // loop_header_branch
      %21 = sbr.rel (%p19) target = $region8
    $region5: #{tpu_custom_call.1} parent=1 // loop_body
      %s23 = ssub.s32 %s18, 1
      %s24 = ssub.s32 %s18, 2
      %s25 = sadd.s32 %s18, 1
      %s26 = ssub.s32 %s18, %s25
      %p27 = scmp.eq.s32.totalorder %s26, 0
      %s29 = sadd.s32 %s28, 1
      %s30 = scalar_select %p27, %s28, %s29
      %p33 = pneg %p27
      %p34 = scmp.eq.s32.totalorder %s18, 1
      %p35 = por %p33, %p34
      %p36 = scmp.ne.s32.totalorder %s28, %s31
      %p37 = scmp.eq.s32.totalorder %s18, 0
      %p38 = por %p36, %p37
      %p39 = scmp.ne.s32.totalorder %s28, %s31
      %p40 = scmp.eq.s32.totalorder %s23, 1
      %p41 = por %p39, %p40
      %p42 = scmp.ne.s32.totalorder %s31, %s32
      %p43 = scmp.eq.s32.totalorder %s23, 0
      %p44 = por %p42, %p43
      %p45 = scmp.ne.s32.totalorder %s31, %s32
      %p46 = scmp.eq.s32.totalorder %s24, 1
      %p47 = por %p45, %p46
      %p49 = scmp.ne.s32.totalorder %s32, %s48
      %p50 = scmp.eq.s32.totalorder %s24, 0
      %p51 = por %p49, %p50
      %s53 = sadd.s32 %s52, 1
      %p56 = scmp.eq.s32.totalorder %s18, 1
      %p57 = scmp.ne.s32.totalorder %s52, %s54
      %p58 = scmp.eq.s32.totalorder %s18, 0
      %p59 = por %p57, %p58
      %p60 = scmp.ne.s32.totalorder %s52, %s54
      %p61 = scmp.eq.s32.totalorder %s23, 1
      %p62 = por %p60, %p61
      %p63 = scmp.ne.s32.totalorder %s54, %s55
      %p64 = scmp.eq.s32.totalorder %s23, 0
      %p65 = por %p63, %p64
      %p66 = scmp.ne.s32.totalorder %s54, %s55
      %p67 = scmp.eq.s32.totalorder %s24, 1
      %p68 = por %p66, %p67
      %p70 = scmp.ne.s32.totalorder %s55, %s69
      %p71 = scmp.eq.s32.totalorder %s24, 0
      %p72 = por %p70, %p71
      %s74 = sadd.s32 %s73, 1
      %p77 = scmp.eq.s32.totalorder %s18, 1
      %p78 = scmp.ne.s32.totalorder %s73, %s75
      %p79 = scmp.eq.s32.totalorder %s18, 0
      %p80 = por %p78, %p79
      %p81 = scmp.ne.s32.totalorder %s73, %s75
      %p82 = scmp.eq.s32.totalorder %s23, 1
      %p83 = por %p81, %p82
      %p84 = scmp.ne.s32.totalorder %s75, %s76
      %p85 = scmp.eq.s32.totalorder %s23, 0
      %p86 = por %p84, %p85
      %p87 = scmp.ne.s32.totalorder %s75, %s76
      %p88 = scmp.eq.s32.totalorder %s24, 1
      %p89 = por %p87, %p88
      %p91 = scmp.ne.s32.totalorder %s76, %s90
      %p92 = scmp.eq.s32.totalorder %s24, 0
      %p93 = por %p91, %p92
      %s95 = sadd.s32 %s94, 1
      %p98 = scmp.eq.s32.totalorder %s18, 1
      %p99 = scmp.ne.s32.totalorder %s94, %s96
      %p100 = scmp.eq.s32.totalorder %s18, 0
      %p101 = por %p99, %p100
      %p102 = scmp.ne.s32.totalorder %s94, %s96
      %p103 = scmp.eq.s32.totalorder %s23, 1
      %p104 = por %p102, %p103
      %p105 = scmp.ne.s32.totalorder %s96, %s97
      %p106 = scmp.eq.s32.totalorder %s23, 0
      %p107 = por %p105, %p106
      %p108 = scmp.ne.s32.totalorder %s96, %s97
      %p109 = scmp.eq.s32.totalorder %s24, 1
      %p110 = por %p108, %p109
      %p112 = scmp.ne.s32.totalorder %s97, %s111
      %p113 = scmp.eq.s32.totalorder %s24, 0
      %p114 = por %p112, %p113
      %s116 = sadd.s32 %s115, 1
      %p119 = scmp.eq.s32.totalorder %s18, 1
      %p120 = scmp.ne.s32.totalorder %s115, %s117
      %p121 = scmp.eq.s32.totalorder %s18, 0
      %p122 = por %p120, %p121
      %p123 = scmp.ne.s32.totalorder %s115, %s117
      %p124 = scmp.eq.s32.totalorder %s23, 1
      %p125 = por %p123, %p124
      %p126 = scmp.ne.s32.totalorder %s117, %s118
      %p127 = scmp.eq.s32.totalorder %s23, 0
      %p128 = por %p126, %p127
      %p129 = scmp.ne.s32.totalorder %s117, %s118
      %p130 = scmp.eq.s32.totalorder %s24, 1
      %p131 = por %p129, %p130
      %p133 = scmp.ne.s32.totalorder %s118, %s132
      %p134 = scmp.eq.s32.totalorder %s24, 0
      %p135 = por %p133, %p134
      %s136 = ssub.s32 %s18, %s25
      %p137 = scmp.eq.s32.totalorder %s136, 0
      %s139 = sadd.s32 %s138, 1
      %s140 = scalar_select %p137, %s138, %s139
      %p143 = pneg %p137
      %p144 = scmp.eq.s32.totalorder %s18, 1
      %p145 = por %p143, %p144
      %p146 = scmp.ne.s32.totalorder %s138, %s141
      %p147 = scmp.eq.s32.totalorder %s18, 0
      %p148 = por %p146, %p147
      %p149 = scmp.ne.s32.totalorder %s138, %s141
      %p150 = scmp.eq.s32.totalorder %s23, 1
      %p151 = por %p149, %p150
      %p152 = scmp.ne.s32.totalorder %s141, %s142
      %p153 = scmp.eq.s32.totalorder %s23, 0
      %p154 = por %p152, %p153
      %p155 = scmp.ne.s32.totalorder %s141, %s142
      %p156 = scmp.eq.s32.totalorder %s24, 1
      %p157 = por %p155, %p156
      %p159 = scmp.ne.s32.totalorder %s142, %s158
      %p160 = scmp.eq.s32.totalorder %s24, 0
      %p161 = por %p159, %p160
      %p162 = scmp.le.s32.totalorder 1, %s18
      %p163 = scmp.lt.s32.totalorder %s18, 3
      %p164 = pnand %p162, %p163
      %p165 = pneg %p164
      // Predicated region
      $region9: #{tpu_custom_call.1} parent=5 // pred_check
        _
      $region10: #{tpu_custom_call.1} parent=5 // pred_check_branch
        %167 = sbr.rel (%p164) target = $region12
      $region11: #{tpu_custom_call.1} parent=5 // pred_region
        %s168 = ssub.s32 %s18, 1
        // Predicated region
        $region13: #{tpu_custom_call.1} parent=11 // pred_check
          %p169 = pneg %p65
        $region14: #{tpu_custom_call.1} parent=11 // pred_check_branch
          %171 = sbr.rel (%p169) target = $region16
        $region15: #{tpu_custom_call.1} parent=11 // pred_region
          _
        $region16: #{tpu_custom_call.1} parent=11 // pred_fallthru
          _
        // Predicated region
        $region17: #{tpu_custom_call.1} parent=11 // pred_check
          %p172 = pneg %p86
        $region18: #{tpu_custom_call.1} parent=11 // pred_check_branch
          %174 = sbr.rel (%p172) target = $region20
        $region19: #{tpu_custom_call.1} parent=11 // pred_region
          _
        $region20: #{tpu_custom_call.1} parent=11 // pred_fallthru
          _
        // Predicated region
        $region21: #{tpu_custom_call.1} parent=11 // pred_check
          %p175 = pneg %p107
        $region22: #{tpu_custom_call.1} parent=11 // pred_check_branch
          %177 = sbr.rel (%p175) target = $region24
        $region23: #{tpu_custom_call.1} parent=11 // pred_region
          %s179 = ssub.s32 256, 256
          %180 = vsyncadd [#allocation6], %s179
          %s181 = sshll.u32 [#allocation5], 4
          %s182 = int_to_ptr.vmem [resolvable:$true] %s181
          %187 = dma.hbm_to_vmem [thread:$0]  %s3, 256, %s182, [#allocation6], 64, 64, 4
        $region24: #{tpu_custom_call.1} parent=11 // pred_fallthru
          _
        // Predicated region
        $region25: #{tpu_custom_call.1} parent=11 // pred_check
          %p188 = pneg %p128
        $region26: #{tpu_custom_call.1} parent=11 // pred_check_branch
          %190 = sbr.rel (%p188) target = $region28
        $region27: #{tpu_custom_call.1} parent=11 // pred_region
          %s192 = ssub.s32 256, 256
          %193 = vsyncadd [#allocation6], %s192
          %s194 = sshll.u32 [#allocation7], 4
          %s195 = int_to_ptr.vmem [resolvable:$true] %s194
          %200 = dma.hbm_to_vmem [thread:$0]  %s4, 256, %s195, [#allocation6], 64, 64, 4
        $region28: #{tpu_custom_call.1} parent=11 // pred_fallthru
          _
      $region12: #{tpu_custom_call.1} parent=5 // pred_fallthru
        _
      %p201 = scmp.lt.s32.totalorder %s18, 2
      // Predicated region
      $region29: #{tpu_custom_call.1} parent=5 // pred_check
        %p202 = pneg %p201
      $region30: #{tpu_custom_call.1} parent=5 // pred_check_branch
        %204 = sbr.rel (%p202) target = $region32
      $region31: #{tpu_custom_call.1} parent=5 // pred_region
        // Predicated region
        $region33: #{tpu_custom_call.1} parent=31 // pred_check
          %p205 = pneg %p38
        $region34: #{tpu_custom_call.1} parent=31 // pred_check_branch
          %207 = sbr.rel (%p205) target = $region36
        $region35: #{tpu_custom_call.1} parent=31 // pred_region
          %s208 = sand.u32 %s28, 1
          %s209 = scalar_lea.sflag [#allocation3], %s208
          %s210 = sand.u32 %s28, 1
          %s211 = smul.addr %s210, 8
          %s212 = scalar_lea.vmem [#allocation2], %s211
          %s214 = ssub.s32 128, 128
          %215 = vsyncadd %s209, %s214
          %s216 = smul.addr %s18, 128
          %s217 = scalar_lea.hbm %s0, %s216
          %s219 = sshll.u32 %s212, 4
          %s220 = int_to_ptr.vmem [resolvable:$true] %s219
          %222 = dma.hbm_to_vmem [thread:$0]  %s217, 128, %s220, %s209
        $region36: #{tpu_custom_call.1} parent=31 // pred_fallthru
          _
      $region32: #{tpu_custom_call.1} parent=5 // pred_fallthru
        _
      %p223 = scmp.le.s32.totalorder 1, %s18
      %p224 = scmp.lt.s32.totalorder %s18, 3
      %p225 = pnand %p223, %p224
      %p226 = pneg %p225
      // Predicated region
      $region37: #{tpu_custom_call.1} parent=5 // pred_check
        _
      $region38: #{tpu_custom_call.1} parent=5 // pred_check_branch
        %228 = sbr.rel (%p225) target = $region40
      $region39: #{tpu_custom_call.1} parent=5 // pred_region
        %s229 = ssub.s32 %s18, 1
        %s230 = sand.u32 %s31, 1
        %s231 = scalar_lea.sflag [#allocation3], %s230
        %s232 = sand.u32 %s31, 1
        %s233 = smul.addr %s232, 8
        %s234 = scalar_lea.vmem [#allocation2], %s233
        // Predicated region
        $region41: #{tpu_custom_call.1} parent=39 // pred_check
          %p235 = pneg %p44
        $region42: #{tpu_custom_call.1} parent=39 // pred_check_branch
          %237 = sbr.rel (%p235) target = $region44
        $region43: #{tpu_custom_call.1} parent=39 // pred_region
          %238 = dma.done %s231, 128
        $region44: #{tpu_custom_call.1} parent=39 // pred_fallthru
          _
        // Predicated region
        $region45: #{tpu_custom_call.1} parent=39 // pred_check
          %p239 = pneg %p107
        $region46: #{tpu_custom_call.1} parent=39 // pred_check_branch
          %241 = sbr.rel (%p239) target = $region48
        $region47: #{tpu_custom_call.1} parent=39 // pred_region
          %242 = dma.done [#allocation6], 256
        $region48: #{tpu_custom_call.1} parent=39 // pred_fallthru
          _
        // Predicated region
        $region49: #{tpu_custom_call.1} parent=39 // pred_check
          %p243 = pneg %p128
        $region50: #{tpu_custom_call.1} parent=39 // pred_check_branch
          %245 = sbr.rel (%p243) target = $region52
        $region51: #{tpu_custom_call.1} parent=39 // pred_region
          %246 = dma.done [#allocation6], 256
        $region52: #{tpu_custom_call.1} parent=39 // pred_fallthru
          _
        %s247 = sand.u32 %s31, 1
        %s248 = scalar_lea.sflag [#allocation3], %s247
        %s249 = sand.u32 %s31, 1
        %s250 = smul.addr %s249, 8
        %s251 = scalar_lea.vmem [#allocation2], %s250
        %p252 = pneg %p44
        %p253 = pneg %p41
        %p254 = pneg %p65
        %p255 = pneg %p62
        %p256 = pneg %p86
        %p257 = pneg %p83
        %p258 = pneg %p107
        %p259 = pneg %p104
        %p260 = pneg %p128
        %p261 = pneg %p125
        %p262 = pneg %p154
        %p263 = pneg %p151
        %s264 = sand.u32 %s141, 1
        %s265 = scalar_lea.sflag [#allocation4], %s264
        %s266 = sand.u32 %s141, 1
        %s267 = smul.addr %s266, 8
        %s268 = scalar_lea.vmem [#allocation8], %s267
        %v270 = vld [vmem:[%s234] sm:$0xff]
        %vm271 = vcmask 261120
        %v272 = vsel %vm271, %v270, 0.0
        %273 = vadd.xlane.f32.xlu0 %v272
        %v274 = vpop.xlane.xlu0 %273
        %v275 = vrcp.pop 32.0
        %v276 = vmul.f32 %v274, %v275
        %v277 = vsub.f32 %v270, %v276
        %v278 = vmul.f32 %v277, %v277
        %v279 = vsel %vm271, %v278, 0.0
        %280 = vadd.xlane.f32.xlu0 %v279
        %v281 = vpop.xlane.xlu0 %280
        %v282 = vmul.f32 %v281, %v275
        %v283 = vadd.f32 %v282, 1e-05
        %v284 = vrsqrt.pop %v283
        %v285 = vmul.f32 %v277, %v284
        %v286 = vld [vmem:[%s1] sm:$0x1]
        %v288 = vlaneseq
        %v289 = vshrl.u32 %v288, 7
        %v290 = vsub.s32 0, %v289
        %v291 = vrot.slane %v286, %v290
        %v293 = vmul.f32 %v285, %v291
        %v294 = vld [vmem:[%s2] sm:$0x1]
        %v296 = vlaneseq
        %v297 = vshrl.u32 %v296, 7
        %v298 = vsub.s32 0, %v297
        %v299 = vrot.slane %v294, %v298
        %v301 = vadd.f32 %v293, %v299
        %v302 = vpack.c.bf16 %v301, %v301
        %v303 = vld [vmem:[#allocation5] sm:$0xf]
        %v304 = vld [vmem:[#allocation5 + $0x4] sm:$0xf]
        %v305 = vld [vmem:[#allocation5 + $0x8] sm:$0xf]
        %v306 = vld [vmem:[#allocation5 + $0xc] sm:$0xf]
        %v311 = vunpack.c.l.b16 %v303
        %v312 = vunpack.c.l.b16 %v304
        %v313 = vunpack.c.l.b16 %v305
        %v314 = vunpack.c.l.b16 %v306
        %v315 = vpack.c.b16 %v312, %v311
        %v316 = vpack.c.b16 %v314, %v313
        %v320 = vsel %vm271, %v302, 0
        %322 = vmatprep.subr.bf16.mxu0 0
        %323 = vmatpush1.bf16.msra.mxu0 0
        %324 = vmatprep.subr.bf16.mxu0 0
        %325 = vmatpush1.bf16.msra.mxu0 0
        %326 = vmatprep.subr.bf16.mxu0 0
        %327 = vmatpush1.bf16.msra.mxu0 0
        %328 = vmatprep.subr.bf16.mxu0 0
        %329 = vmatpush1.bf16.msra.mxu0 0
        %330 = vmatprep.subr.bf16.mxu0 0
        %331 = vmatpush1.bf16.msra.mxu0 0
        %332 = vmatprep.subr.bf16.mxu0 0
        %333 = vmatpush1.bf16.msra.mxu0 0
        %334 = vmatprep.subr.bf16.mxu0 0
        %335 = vmatpush1.bf16.msra.mxu0 %v316
        %336 = vmatprep.subr.bf16.mxu0 0
        %337 = vmatpush1.bf16.msra.mxu0 %v315
        %338 = vmatprep.subr.bf16.mxu0 0
        %339 = vmatpush2.bf16.msra.mxu0 0
        %340 = vmatprep.subr.bf16.mxu0 0
        %341 = vmatpush2.bf16.msra.mxu0 0
        %342 = vmatprep.subr.bf16.mxu0 0
        %343 = vmatpush2.bf16.msra.mxu0 0
        %344 = vmatprep.subr.bf16.mxu0 0
        %345 = vmatpush2.bf16.msra.mxu0 0
        %346 = vmatprep.subr.bf16.mxu0 0
        %347 = vmatpush2.bf16.msra.mxu0 0
        %348 = vmatprep.subr.bf16.mxu0 0
        %349 = vmatpush2.bf16.msra.mxu0 0
        %350 = vmatprep.subr.bf16.mxu0 0
        %351 = vmatpush2.bf16.msra.mxu0 0
        %352 = vmatprep.subr.bf16.mxu0 0
        %353 = vmatpush2.bf16.msra.mxu0 0
        %354 = vmatprep.mubr.bf16.mxu0 0
        %355 = vmatmul.mubr.bf16.gmra.mxu0 %v320
        %v356 = vpop.f32.mrf.mxu0
        %v357 = vadd.f32 0.0, %v356
        %v358 = vpop.f32.mrf.mxu0
        %v359 = vpop.f32.mrf.mxu0
        %v360 = vpop.f32.mrf.mxu0
        %361 = vdwg.mxu0
        %363 = vrot.lane.b32.xlu0 %v357, 120
        %v364 = vpop.permute.xlu0 %363
        %366 = vrot.lane.b32.xlu0 %v357, 112
        %v367 = vpop.permute.xlu0 %366
        %369 = vrot.lane.b32.xlu0 %v357, 104
        %v370 = vpop.permute.xlu0 %369
        %372 = vrot.lane.b32.xlu0 %v357, 96
        %v373 = vpop.permute.xlu0 %372
        %375 = vrot.lane.b32.xlu0 %v357, 88
        %v376 = vpop.permute.xlu0 %375
        %378 = vrot.lane.b32.xlu0 %v357, 80
        %v379 = vpop.permute.xlu0 %378
        %381 = vrot.lane.b32.xlu0 %v357, 72
        %v382 = vpop.permute.xlu0 %381
        %384 = vrot.lane.b32.xlu0 %v357, 64
        %v385 = vpop.permute.xlu0 %384
        %387 = vrot.lane.b32.xlu0 %v357, 56
        %v388 = vpop.permute.xlu0 %387
        %390 = vrot.lane.b32.xlu0 %v357, 48
        %v391 = vpop.permute.xlu0 %390
        %393 = vrot.lane.b32.xlu0 %v357, 40
        %v394 = vpop.permute.xlu0 %393
        %v396 = vcombine.low %v357, %v367
        %v397 = vcombine.high %v357, %v367
        %v399 = vunpack.c.l.s4 1983009808
        %v400 = vunpack.c.0.s8 %v399
        %v401 = vlaneseq
        %v402 = vshrl.u32 %v401, 7
        %v403 = vsub.s32 %v400, %v402
        %v404 = vrot.slane %v396, %v403
        %v406 = vunpack.c.l.s4 1983009808
        %v407 = vunpack.c.0.s8 %v406
        %v408 = vlaneseq
        %v409 = vshrl.u32 %v408, 7
        %v410 = vsub.s32 %v407, %v409
        %v411 = vrot.slane %v397, %v410
        %v412 = vcombine.low %v364, %v370
        %v413 = vcombine.high %v364, %v370
        %v415 = vunpack.c.l.s4 1983009808
        %v416 = vunpack.c.0.s8 %v415
        %v417 = vlaneseq
        %v418 = vshrl.u32 %v417, 7
        %v419 = vsub.s32 %v416, %v418
        %v420 = vrot.slane %v412, %v419
        %v422 = vunpack.c.l.s4 1983009808
        %v423 = vunpack.c.0.s8 %v422
        %v424 = vlaneseq
        %v425 = vshrl.u32 %v424, 7
        %v426 = vsub.s32 %v423, %v425
        %v427 = vrot.slane %v413, %v426
        %v428 = vcombine.low %v373, %v379
        %v429 = vcombine.high %v373, %v379
        %v431 = vunpack.c.l.s4 1983009808
        %v432 = vunpack.c.0.s8 %v431
        %v433 = vlaneseq
        %v434 = vshrl.u32 %v433, 7
        %v435 = vsub.s32 %v432, %v434
        %v436 = vrot.slane %v428, %v435
        %v438 = vunpack.c.l.s4 1983009808
        %v439 = vunpack.c.0.s8 %v438
        %v440 = vlaneseq
        %v441 = vshrl.u32 %v440, 7
        %v442 = vsub.s32 %v439, %v441
        %v443 = vrot.slane %v429, %v442
        %v444 = vcombine.low %v376, %v382
        %v445 = vcombine.high %v376, %v382
        %v447 = vunpack.c.l.s4 1983009808
        %v448 = vunpack.c.0.s8 %v447
        %v449 = vlaneseq
        %v450 = vshrl.u32 %v449, 7
        %v451 = vsub.s32 %v448, %v450
        %v452 = vrot.slane %v444, %v451
        %v454 = vunpack.c.l.s4 1983009808
        %v455 = vunpack.c.0.s8 %v454
        %v456 = vlaneseq
        %v457 = vshrl.u32 %v456, 7
        %v458 = vsub.s32 %v455, %v457
        %v459 = vrot.slane %v445, %v458
        %v460 = vcombine.low %v404, %v420
        %v461 = vcombine.high %v404, %v420
        %v463 = vunpack.c.l.s4 1934713408
        %v464 = vunpack.c.0.s8 %v463
        %v465 = vlaneseq
        %v466 = vshrl.u32 %v465, 7
        %v467 = vsub.s32 %v464, %v466
        %v468 = vrot.slane %v460, %v467
        %v470 = vunpack.c.l.s4 1934713408
        %v471 = vunpack.c.0.s8 %v470
        %v472 = vlaneseq
        %v473 = vshrl.u32 %v472, 7
        %v474 = vsub.s32 %v471, %v473
        %v475 = vrot.slane %v461, %v474
        %v476 = vcombine.low %v411, %v427
        %v477 = vcombine.high %v411, %v427
        %v479 = vunpack.c.l.s4 1934713408
        %v480 = vunpack.c.0.s8 %v479
        %v481 = vlaneseq
        %v482 = vshrl.u32 %v481, 7
        %v483 = vsub.s32 %v480, %v482
        %v484 = vrot.slane %v476, %v483
        %v486 = vunpack.c.l.s4 1934713408
        %v487 = vunpack.c.0.s8 %v486
        %v488 = vlaneseq
        %v489 = vshrl.u32 %v488, 7
        %v490 = vsub.s32 %v487, %v489
        %v491 = vrot.slane %v477, %v490
        %v492 = vcombine.low %v436, %v452
        %v493 = vcombine.high %v436, %v452
        %v495 = vunpack.c.l.s4 1934713408
        %v496 = vunpack.c.0.s8 %v495
        %v497 = vlaneseq
        %v498 = vshrl.u32 %v497, 7
        %v499 = vsub.s32 %v496, %v498
        %v500 = vrot.slane %v492, %v499
        %v502 = vunpack.c.l.s4 1934713408
        %v503 = vunpack.c.0.s8 %v502
        %v504 = vlaneseq
        %v505 = vshrl.u32 %v504, 7
        %v506 = vsub.s32 %v503, %v505
        %v507 = vrot.slane %v493, %v506
        %v508 = vcombine.low %v443, %v459
        %v509 = vcombine.high %v443, %v459
        %v511 = vunpack.c.l.s4 1934713408
        %v512 = vunpack.c.0.s8 %v511
        %v513 = vlaneseq
        %v514 = vshrl.u32 %v513, 7
        %v515 = vsub.s32 %v512, %v514
        %v516 = vrot.slane %v508, %v515
        %v518 = vunpack.c.l.s4 1934713408
        %v519 = vunpack.c.0.s8 %v518
        %v520 = vlaneseq
        %v521 = vshrl.u32 %v520, 7
        %v522 = vsub.s32 %v519, %v521
        %v523 = vrot.slane %v509, %v522
        %v524 = vcombine.low %v468, %v500
        %v525 = vcombine.high %v468, %v500
        %v526 = vcombine.low %v475, %v507
        %v527 = vcombine.high %v475, %v507
        %v528 = vcombine.low %v484, %v516
        %v529 = vcombine.high %v484, %v516
        %v530 = vcombine.low %v491, %v523
        %v531 = vcombine.high %v491, %v523
        %v532 = vcombine.low %v385, %v391
        %v533 = vcombine.high %v385, %v391
        %v535 = vunpack.c.l.s4 1983009808
        %v536 = vunpack.c.0.s8 %v535
        %v537 = vlaneseq
        %v538 = vshrl.u32 %v537, 7
        %v539 = vsub.s32 %v536, %v538
        %v540 = vrot.slane %v532, %v539
        %v542 = vunpack.c.l.s4 1983009808
        %v543 = vunpack.c.0.s8 %v542
        %v544 = vlaneseq
        %v545 = vshrl.u32 %v544, 7
        %v546 = vsub.s32 %v543, %v545
        %v547 = vrot.slane %v533, %v546
        %v548 = vcombine.low %v388, %v394
        %v549 = vcombine.high %v388, %v394
        %v551 = vunpack.c.l.s4 1983009808
        %v552 = vunpack.c.0.s8 %v551
        %v553 = vlaneseq
        %v554 = vshrl.u32 %v553, 7
        %v555 = vsub.s32 %v552, %v554
        %v556 = vrot.slane %v548, %v555
        %v558 = vunpack.c.l.s4 1983009808
        %v559 = vunpack.c.0.s8 %v558
        %v560 = vlaneseq
        %v561 = vshrl.u32 %v560, 7
        %v562 = vsub.s32 %v559, %v561
        %v563 = vrot.slane %v549, %v562
        %v564 = vcombine.low %v540, %v556
        %v565 = vcombine.high %v540, %v556
        %v567 = vunpack.c.l.s4 1934713408
        %v568 = vunpack.c.0.s8 %v567
        %v569 = vlaneseq
        %v570 = vshrl.u32 %v569, 7
        %v571 = vsub.s32 %v568, %v570
        %v572 = vrot.slane %v564, %v571
        %v574 = vunpack.c.l.s4 1934713408
        %v575 = vunpack.c.0.s8 %v574
        %v576 = vlaneseq
        %v577 = vshrl.u32 %v576, 7
        %v578 = vsub.s32 %v575, %v577
        %v579 = vrot.slane %v565, %v578
        %v580 = vcombine.low %v547, %v563
        %v581 = vcombine.high %v547, %v563
        %v583 = vunpack.c.l.s4 1934713408
        %v584 = vunpack.c.0.s8 %v583
        %v585 = vlaneseq
        %v586 = vshrl.u32 %v585, 7
        %v587 = vsub.s32 %v584, %v586
        %v588 = vrot.slane %v580, %v587
        %v590 = vunpack.c.l.s4 1934713408
        %v591 = vunpack.c.0.s8 %v590
        %v592 = vlaneseq
        %v593 = vshrl.u32 %v592, 7
        %v594 = vsub.s32 %v591, %v593
        %v595 = vrot.slane %v581, %v594
        %v596 = vcombine.high %v572, 0.0
        %v597 = vcombine.high %v579, 0.0
        %v598 = vcombine.high %v588, 0.0
        %v599 = vcombine.high %v595, 0.0
        %v600 = vcombine.low %v524, %v526
        %v601 = vcombine.high %v524, %v526
        %v603 = vunpack.c.l.s4 1983009808
        %v604 = vunpack.c.0.s8 %v603
        %v605 = vlaneseq
        %v606 = vshrl.u32 %v605, 7
        %v607 = vsub.s32 %v604, %v606
        %v608 = vrot.slane %v600, %v607
        %v610 = vunpack.c.l.s4 1983009808
        %v611 = vunpack.c.0.s8 %v610
        %v612 = vlaneseq
        %v613 = vshrl.u32 %v612, 7
        %v614 = vsub.s32 %v611, %v613
        %v615 = vrot.slane %v601, %v614
        %v616 = vcombine.low %v525, %v527
        %v617 = vcombine.high %v525, %v527
        %v619 = vunpack.c.l.s4 1983009808
        %v620 = vunpack.c.0.s8 %v619
        %v621 = vlaneseq
        %v622 = vshrl.u32 %v621, 7
        %v623 = vsub.s32 %v620, %v622
        %v624 = vrot.slane %v616, %v623
        %v626 = vunpack.c.l.s4 1983009808
        %v627 = vunpack.c.0.s8 %v626
        %v628 = vlaneseq
        %v629 = vshrl.u32 %v628, 7
        %v630 = vsub.s32 %v627, %v629
        %v631 = vrot.slane %v617, %v630
        %v632 = vcombine.low %v528, %v530
        %v633 = vcombine.high %v528, %v530
        %v635 = vunpack.c.l.s4 1983009808
        %v636 = vunpack.c.0.s8 %v635
        %v637 = vlaneseq
        %v638 = vshrl.u32 %v637, 7
        %v639 = vsub.s32 %v636, %v638
        %v640 = vrot.slane %v632, %v639
        %v642 = vunpack.c.l.s4 1983009808
        %v643 = vunpack.c.0.s8 %v642
        %v644 = vlaneseq
        %v645 = vshrl.u32 %v644, 7
        %v646 = vsub.s32 %v643, %v645
        %v647 = vrot.slane %v633, %v646
        %v648 = vcombine.low %v529, %v531
        %v649 = vcombine.high %v529, %v531
        %v651 = vunpack.c.l.s4 1983009808
        %v652 = vunpack.c.0.s8 %v651
        %v653 = vlaneseq
        %v654 = vshrl.u32 %v653, 7
        %v655 = vsub.s32 %v652, %v654
        %v656 = vrot.slane %v648, %v655
        %v658 = vunpack.c.l.s4 1983009808
        %v659 = vunpack.c.0.s8 %v658
        %v660 = vlaneseq
        %v661 = vshrl.u32 %v660, 7
        %v662 = vsub.s32 %v659, %v661
        %v663 = vrot.slane %v649, %v662
        %v664 = vcombine.low %v608, %v624
        %v665 = vcombine.high %v608, %v624
        %v667 = vunpack.c.l.s4 1934713408
        %v668 = vunpack.c.0.s8 %v667
        %v669 = vlaneseq
        %v670 = vshrl.u32 %v669, 7
        %v671 = vsub.s32 %v668, %v670
        %v672 = vrot.slane %v664, %v671
        %v674 = vunpack.c.l.s4 1934713408
        %v675 = vunpack.c.0.s8 %v674
        %v676 = vlaneseq
        %v677 = vshrl.u32 %v676, 7
        %v678 = vsub.s32 %v675, %v677
        %v679 = vrot.slane %v665, %v678
        %v680 = vcombine.low %v615, %v631
        %v681 = vcombine.high %v615, %v631
        %v683 = vunpack.c.l.s4 1934713408
        %v684 = vunpack.c.0.s8 %v683
        %v685 = vlaneseq
        %v686 = vshrl.u32 %v685, 7
        %v687 = vsub.s32 %v684, %v686
        %v688 = vrot.slane %v680, %v687
        %v690 = vunpack.c.l.s4 1934713408
        %v691 = vunpack.c.0.s8 %v690
        %v692 = vlaneseq
        %v693 = vshrl.u32 %v692, 7
        %v694 = vsub.s32 %v691, %v693
        %v695 = vrot.slane %v681, %v694
        %v696 = vcombine.low %v640, %v656
        %v697 = vcombine.high %v640, %v656
        %v699 = vunpack.c.l.s4 1934713408
        %v700 = vunpack.c.0.s8 %v699
        %v701 = vlaneseq
        %v702 = vshrl.u32 %v701, 7
        %v703 = vsub.s32 %v700, %v702
        %v704 = vrot.slane %v696, %v703
        %v706 = vunpack.c.l.s4 1934713408
        %v707 = vunpack.c.0.s8 %v706
        %v708 = vlaneseq
        %v709 = vshrl.u32 %v708, 7
        %v710 = vsub.s32 %v707, %v709
        %v711 = vrot.slane %v697, %v710
        %v712 = vcombine.low %v647, %v663
        %v713 = vcombine.high %v647, %v663
        %v715 = vunpack.c.l.s4 1934713408
        %v716 = vunpack.c.0.s8 %v715
        %v717 = vlaneseq
        %v718 = vshrl.u32 %v717, 7
        %v719 = vsub.s32 %v716, %v718
        %v720 = vrot.slane %v712, %v719
        %v722 = vunpack.c.l.s4 1934713408
        %v723 = vunpack.c.0.s8 %v722
        %v724 = vlaneseq
        %v725 = vshrl.u32 %v724, 7
        %v726 = vsub.s32 %v723, %v725
        %v727 = vrot.slane %v713, %v726
        %v728 = vcombine.low %v672, %v704
        %v729 = vcombine.high %v672, %v704
        %v730 = vcombine.low %v679, %v711
        %v731 = vcombine.high %v679, %v711
        %v732 = vcombine.low %v688, %v720
        %v733 = vcombine.high %v688, %v720
        %v734 = vcombine.low %v695, %v727
        %v735 = vcombine.high %v695, %v727
        %v736 = vcombine.low %v572, %v579
        %v738 = vunpack.c.l.s4 1983009808
        %v739 = vunpack.c.0.s8 %v738
        %v740 = vlaneseq
        %v741 = vshrl.u32 %v740, 7
        %v742 = vsub.s32 %v739, %v741
        %v743 = vrot.slane %v736, %v742
        %v744 = vcombine.low %v596, %v597
        %v746 = vunpack.c.l.s4 1983009808
        %v747 = vunpack.c.0.s8 %v746
        %v748 = vlaneseq
        %v749 = vshrl.u32 %v748, 7
        %v750 = vsub.s32 %v747, %v749
        %v751 = vrot.slane %v744, %v750
        %v752 = vcombine.low %v588, %v595
        %v754 = vunpack.c.l.s4 1983009808
        %v755 = vunpack.c.0.s8 %v754
        %v756 = vlaneseq
        %v757 = vshrl.u32 %v756, 7
        %v758 = vsub.s32 %v755, %v757
        %v759 = vrot.slane %v752, %v758
        %v760 = vcombine.low %v598, %v599
        %v762 = vunpack.c.l.s4 1983009808
        %v763 = vunpack.c.0.s8 %v762
        %v764 = vlaneseq
        %v765 = vshrl.u32 %v764, 7
        %v766 = vsub.s32 %v763, %v765
        %v767 = vrot.slane %v760, %v766
        %v768 = vcombine.low %v743, %v751
        %v769 = vcombine.high %v743, %v751
        %v771 = vunpack.c.l.s4 1934713408
        %v772 = vunpack.c.0.s8 %v771
        %v773 = vlaneseq
        %v774 = vshrl.u32 %v773, 7
        %v775 = vsub.s32 %v772, %v774
        %v776 = vrot.slane %v768, %v775
        %v778 = vunpack.c.l.s4 1934713408
        %v779 = vunpack.c.0.s8 %v778
        %v780 = vlaneseq
        %v781 = vshrl.u32 %v780, 7
        %v782 = vsub.s32 %v779, %v781
        %v783 = vrot.slane %v769, %v782
        %v784 = vcombine.low %v759, %v767
        %v785 = vcombine.high %v759, %v767
        %v787 = vunpack.c.l.s4 1934713408
        %v788 = vunpack.c.0.s8 %v787
        %v789 = vlaneseq
        %v790 = vshrl.u32 %v789, 7
        %v791 = vsub.s32 %v788, %v790
        %v792 = vrot.slane %v784, %v791
        %v794 = vunpack.c.l.s4 1934713408
        %v795 = vunpack.c.0.s8 %v794
        %v796 = vlaneseq
        %v797 = vshrl.u32 %v796, 7
        %v798 = vsub.s32 %v795, %v797
        %v799 = vrot.slane %v785, %v798
        %v800 = vcombine.low %v776, %v792
        %v801 = vcombine.high %v776, %v792
        %v802 = vcombine.low %v783, %v799
        %v803 = vcombine.high %v783, %v799
        %v804 = vpack.c.bf16 %v728, %v728
        %v805 = vpack.c.bf16 %v729, %v729
        %v806 = vpack.c.bf16 %v730, %v730
        %v807 = vpack.c.bf16 %v731, %v731
        %v808 = vpack.c.bf16 %v732, %v732
        %v809 = vpack.c.bf16 %v733, %v733
        %v810 = vpack.c.bf16 %v734, %v734
        %v811 = vpack.c.bf16 %v735, %v735
        %v812 = vpack.c.bf16 %v800, %v800
        %v813 = vpack.c.bf16 %v801, %v801
        %v814 = vpack.c.bf16 %v802, %v802
        %v815 = vpack.c.bf16 %v803, %v803
        %vm816 = vcmask 64512
        %v818 = vsel %vm816, %v804, 0
        %v821 = vsel %vm816, %v808, 0
        %823 = vmatprep.subr.bf16.mxu0 0
        %824 = vmatpush1.bf16.xpose.msra.mxu0 0
        %825 = vmatprep.subr.bf16.mxu0 0
        %826 = vmatpush1.bf16.xpose.msra.mxu0 0
        %827 = vmatprep.subr.bf16.mxu0 0
        %828 = vmatpush1.bf16.xpose.msra.mxu0 0
        %829 = vmatprep.subr.bf16.mxu0 0
        %830 = vmatpush1.bf16.xpose.msra.mxu0 0
        %831 = vmatprep.subr.bf16.mxu0 0
        %832 = vmatpush1.bf16.xpose.msra.mxu0 0
        %833 = vmatprep.subr.bf16.mxu0 0
        %834 = vmatpush1.bf16.xpose.msra.mxu0 0
        %835 = vmatprep.subr.bf16.mxu0 0
        %836 = vmatpush1.bf16.xpose.msra.mxu0 0
        %837 = vmatprep.subr.bf16.mxu0 0
        %838 = vmatpush1.bf16.xpose.msra.mxu0 %v821
        %839 = vmatprep.subr.bf16.mxu0 0
        %840 = vmatpush2.bf16.xpose.msra.mxu0 0
        %841 = vmatprep.subr.bf16.mxu0 0
        %842 = vmatpush2.bf16.xpose.msra.mxu0 0
        %843 = vmatprep.subr.bf16.mxu0 0
        %844 = vmatpush2.bf16.xpose.msra.mxu0 0
        %845 = vmatprep.subr.bf16.mxu0 0
        %846 = vmatpush2.bf16.xpose.msra.mxu0 0
        %847 = vmatprep.subr.bf16.mxu0 0
        %848 = vmatpush2.bf16.xpose.msra.mxu0 0
        %849 = vmatprep.subr.bf16.mxu0 0
        %850 = vmatpush2.bf16.xpose.msra.mxu0 0
        %851 = vmatprep.subr.bf16.mxu0 0
        %852 = vmatpush2.bf16.xpose.msra.mxu0 0
        %853 = vmatprep.subr.bf16.mxu0 0
        %854 = vmatpush2.bf16.xpose.msra.mxu0 0
        %855 = vmatprep.mubr.bf16.mxu0 0
        %856 = vmatmul.mubr.bf16.gmra.mxu0 %v818
        %v857 = vpop.f32.mrf.mxu0
        %v858 = vadd.f32 0.0, %v857
        %v859 = vpop.f32.mrf.mxu0
        %v860 = vpop.f32.mrf.mxu0
        %v861 = vpop.f32.mrf.mxu0
        %862 = vdwg.mxu0
        %v864 = vsel %vm816, %v805, 0
        %v867 = vsel %vm816, %v809, 0
        %869 = vmatprep.subr.bf16.mxu0 0
        %870 = vmatpush1.bf16.xpose.msra.mxu0 0
        %871 = vmatprep.subr.bf16.mxu0 0
        %872 = vmatpush1.bf16.xpose.msra.mxu0 0
        %873 = vmatprep.subr.bf16.mxu0 0
        %874 = vmatpush1.bf16.xpose.msra.mxu0 0
        %875 = vmatprep.subr.bf16.mxu0 0
        %876 = vmatpush1.bf16.xpose.msra.mxu0 0
        %877 = vmatprep.subr.bf16.mxu0 0
        %878 = vmatpush1.bf16.xpose.msra.mxu0 0
        %879 = vmatprep.subr.bf16.mxu0 0
        %880 = vmatpush1.bf16.xpose.msra.mxu0 0
        %881 = vmatprep.subr.bf16.mxu0 0
        %882 = vmatpush1.bf16.xpose.msra.mxu0 0
        %883 = vmatprep.subr.bf16.mxu0 0
        %884 = vmatpush1.bf16.xpose.msra.mxu0 %v867
        %885 = vmatprep.subr.bf16.mxu0 0
        %886 = vmatpush2.bf16.xpose.msra.mxu0 0
        %887 = vmatprep.subr.bf16.mxu0 0
        %888 = vmatpush2.bf16.xpose.msra.mxu0 0
        %889 = vmatprep.subr.bf16.mxu0 0
        %890 = vmatpush2.bf16.xpose.msra.mxu0 0
        %891 = vmatprep.subr.bf16.mxu0 0
        %892 = vmatpush2.bf16.xpose.msra.mxu0 0
        %893 = vmatprep.subr.bf16.mxu0 0
        %894 = vmatpush2.bf16.xpose.msra.mxu0 0
        %895 = vmatprep.subr.bf16.mxu0 0
        %896 = vmatpush2.bf16.xpose.msra.mxu0 0
        %897 = vmatprep.subr.bf16.mxu0 0
        %898 = vmatpush2.bf16.xpose.msra.mxu0 0
        %899 = vmatprep.subr.bf16.mxu0 0
        %900 = vmatpush2.bf16.xpose.msra.mxu0 0
        %901 = vmatprep.mubr.bf16.mxu0 0
        %902 = vmatmul.mubr.bf16.gmra.mxu0 %v864
        %v903 = vpop.f32.mrf.mxu0
        %v904 = vadd.f32 0.0, %v903
        %v905 = vpop.f32.mrf.mxu0
        %v906 = vpop.f32.mrf.mxu0
        %v907 = vpop.f32.mrf.mxu0
        %908 = vdwg.mxu0
        %v910 = vsel %vm816, %v806, 0
        %v913 = vsel %vm816, %v810, 0
        %915 = vmatprep.subr.bf16.mxu0 0
        %916 = vmatpush1.bf16.xpose.msra.mxu0 0
        %917 = vmatprep.subr.bf16.mxu0 0
        %918 = vmatpush1.bf16.xpose.msra.mxu0 0
        %919 = vmatprep.subr.bf16.mxu0 0
        %920 = vmatpush1.bf16.xpose.msra.mxu0 0
        %921 = vmatprep.subr.bf16.mxu0 0
        %922 = vmatpush1.bf16.xpose.msra.mxu0 0
        %923 = vmatprep.subr.bf16.mxu0 0
        %924 = vmatpush1.bf16.xpose.msra.mxu0 0
        %925 = vmatprep.subr.bf16.mxu0 0
        %926 = vmatpush1.bf16.xpose.msra.mxu0 0
        %927 = vmatprep.subr.bf16.mxu0 0
        %928 = vmatpush1.bf16.xpose.msra.mxu0 0
        %929 = vmatprep.subr.bf16.mxu0 0
        %930 = vmatpush1.bf16.xpose.msra.mxu0 %v913
        %931 = vmatprep.subr.bf16.mxu0 0
        %932 = vmatpush2.bf16.xpose.msra.mxu0 0
        %933 = vmatprep.subr.bf16.mxu0 0
        %934 = vmatpush2.bf16.xpose.msra.mxu0 0
        %935 = vmatprep.subr.bf16.mxu0 0
        %936 = vmatpush2.bf16.xpose.msra.mxu0 0
        %937 = vmatprep.subr.bf16.mxu0 0
        %938 = vmatpush2.bf16.xpose.msra.mxu0 0
        %939 = vmatprep.subr.bf16.mxu0 0
        %940 = vmatpush2.bf16.xpose.msra.mxu0 0
        %941 = vmatprep.subr.bf16.mxu0 0
        %942 = vmatpush2.bf16.xpose.msra.mxu0 0
        %943 = vmatprep.subr.bf16.mxu0 0
        %944 = vmatpush2.bf16.xpose.msra.mxu0 0
        %945 = vmatprep.subr.bf16.mxu0 0
        %946 = vmatpush2.bf16.xpose.msra.mxu0 0
        %947 = vmatprep.mubr.bf16.mxu0 0
        %948 = vmatmul.mubr.bf16.gmra.mxu0 %v910
        %v949 = vpop.f32.mrf.mxu0
        %v950 = vadd.f32 0.0, %v949
        %v951 = vpop.f32.mrf.mxu0
        %v952 = vpop.f32.mrf.mxu0
        %v953 = vpop.f32.mrf.mxu0
        %954 = vdwg.mxu0
        %v956 = vsel %vm816, %v807, 0
        %v959 = vsel %vm816, %v811, 0
        %961 = vmatprep.subr.bf16.mxu0 0
        %962 = vmatpush1.bf16.xpose.msra.mxu0 0
        %963 = vmatprep.subr.bf16.mxu0 0
        %964 = vmatpush1.bf16.xpose.msra.mxu0 0
        %965 = vmatprep.subr.bf16.mxu0 0
        %966 = vmatpush1.bf16.xpose.msra.mxu0 0
        %967 = vmatprep.subr.bf16.mxu0 0
        %968 = vmatpush1.bf16.xpose.msra.mxu0 0
        %969 = vmatprep.subr.bf16.mxu0 0
        %970 = vmatpush1.bf16.xpose.msra.mxu0 0
        %971 = vmatprep.subr.bf16.mxu0 0
        %972 = vmatpush1.bf16.xpose.msra.mxu0 0
        %973 = vmatprep.subr.bf16.mxu0 0
        %974 = vmatpush1.bf16.xpose.msra.mxu0 0
        %975 = vmatprep.subr.bf16.mxu0 0
        %976 = vmatpush1.bf16.xpose.msra.mxu0 %v959
        %977 = vmatprep.subr.bf16.mxu0 0
        %978 = vmatpush2.bf16.xpose.msra.mxu0 0
        %979 = vmatprep.subr.bf16.mxu0 0
        %980 = vmatpush2.bf16.xpose.msra.mxu0 0
        %981 = vmatprep.subr.bf16.mxu0 0
        %982 = vmatpush2.bf16.xpose.msra.mxu0 0
        %983 = vmatprep.subr.bf16.mxu0 0
        %984 = vmatpush2.bf16.xpose.msra.mxu0 0
        %985 = vmatprep.subr.bf16.mxu0 0
        %986 = vmatpush2.bf16.xpose.msra.mxu0 0
        %987 = vmatprep.subr.bf16.mxu0 0
        %988 = vmatpush2.bf16.xpose.msra.mxu0 0
        %989 = vmatprep.subr.bf16.mxu0 0
        %990 = vmatpush2.bf16.xpose.msra.mxu0 0
        %991 = vmatprep.subr.bf16.mxu0 0
        %992 = vmatpush2.bf16.xpose.msra.mxu0 0
        %993 = vmatprep.mubr.bf16.mxu0 0
        %994 = vmatmul.mubr.bf16.gmra.mxu0 %v956
        %v995 = vpop.f32.mrf.mxu0
        %v996 = vadd.f32 0.0, %v995
        %v997 = vpop.f32.mrf.mxu0
        %v998 = vpop.f32.mrf.mxu0
        %v999 = vpop.f32.mrf.mxu0
        %1000 = vdwg.mxu0
        %v1001 = vsel %vm816, %v858, -inf
        %1002 = vmax.xlane.f32.xlu0 %v1001
        %v1003 = vpop.xlane.xlu0 %1002
        %v1004 = vsel %vm816, %v904, -inf
        %1005 = vmax.xlane.f32.xlu0 %v1004
        %v1006 = vpop.xlane.xlu0 %1005
        %v1007 = vsel %vm816, %v950, -inf
        %1008 = vmax.xlane.f32.xlu0 %v1007
        %v1009 = vpop.xlane.xlu0 %1008
        %v1010 = vsel %vm816, %v996, -inf
        %1011 = vmax.xlane.f32.xlu0 %v1010
        %v1012 = vpop.xlane.xlu0 %1011
        %v1013 = vsub.f32 %v858, %v1003
        %v1014 = vsub.f32 %v904, %v1006
        %v1015 = vsub.f32 %v950, %v1009
        %v1016 = vsub.f32 %v996, %v1012
        %v1017 = vmul.f32 %v1013, 1.442695
        %v1018 = vpow.pop %v1017
        %v1019 = vmul.f32 %v1014, 1.442695
        %v1020 = vpow.pop %v1019
        %v1021 = vmul.f32 %v1015, 1.442695
        %v1022 = vpow.pop %v1021
        %v1023 = vmul.f32 %v1016, 1.442695
        %v1024 = vpow.pop %v1023
        %v1025 = vsel %vm816, %v1018, 0.0
        %1026 = vadd.xlane.f32.xlu0 %v1025
        %v1027 = vpop.xlane.xlu0 %1026
        %v1028 = vsel %vm816, %v1020, 0.0
        %1029 = vadd.xlane.f32.xlu0 %v1028
        %v1030 = vpop.xlane.xlu0 %1029
        %v1031 = vsel %vm816, %v1022, 0.0
        %1032 = vadd.xlane.f32.xlu0 %v1031
        %v1033 = vpop.xlane.xlu0 %1032
        %v1034 = vsel %vm816, %v1024, 0.0
        %1035 = vadd.xlane.f32.xlu0 %v1034
        %v1036 = vpop.xlane.xlu0 %1035
        %v1037 = vpack.c.bf16 %v1018, %v1018
        %v1038 = vpack.c.bf16 %v1020, %v1020
        %v1039 = vpack.c.bf16 %v1022, %v1022
        %v1040 = vpack.c.bf16 %v1024, %v1024
        %v1042 = vsel %vm816, %v1037, 0
        %vm1044 = vcmask 1043456
        %v1046 = vsel %vm1044, %v812, 0
        %1048 = vmatprep.subr.bf16.mxu0 0
        %1049 = vmatpush1.bf16.msra.mxu0 0
        %1050 = vmatprep.subr.bf16.mxu0 0
        %1051 = vmatpush1.bf16.msra.mxu0 0
        %1052 = vmatprep.subr.bf16.mxu0 0
        %1053 = vmatpush1.bf16.msra.mxu0 0
        %1054 = vmatprep.subr.bf16.mxu0 0
        %1055 = vmatpush1.bf16.msra.mxu0 0
        %1056 = vmatprep.subr.bf16.mxu0 0
        %1057 = vmatpush1.bf16.msra.mxu0 0
        %1058 = vmatprep.subr.bf16.mxu0 0
        %1059 = vmatpush1.bf16.msra.mxu0 0
        %1060 = vmatprep.subr.bf16.mxu0 0
        %1061 = vmatpush1.bf16.msra.mxu0 0
        %1062 = vmatprep.subr.bf16.mxu0 0
        %1063 = vmatpush1.bf16.msra.mxu0 %v1046
        %1064 = vmatprep.subr.bf16.mxu0 0
        %1065 = vmatpush2.bf16.msra.mxu0 0
        %1066 = vmatprep.subr.bf16.mxu0 0
        %1067 = vmatpush2.bf16.msra.mxu0 0
        %1068 = vmatprep.subr.bf16.mxu0 0
        %1069 = vmatpush2.bf16.msra.mxu0 0
        %1070 = vmatprep.subr.bf16.mxu0 0
        %1071 = vmatpush2.bf16.msra.mxu0 0
        %1072 = vmatprep.subr.bf16.mxu0 0
        %1073 = vmatpush2.bf16.msra.mxu0 0
        %1074 = vmatprep.subr.bf16.mxu0 0
        %1075 = vmatpush2.bf16.msra.mxu0 0
        %1076 = vmatprep.subr.bf16.mxu0 0
        %1077 = vmatpush2.bf16.msra.mxu0 0
        %1078 = vmatprep.subr.bf16.mxu0 0
        %1079 = vmatpush2.bf16.msra.mxu0 0
        %1080 = vmatprep.mubr.bf16.mxu0 0
        %1081 = vmatmul.mubr.bf16.gmra.mxu0 %v1042
        %v1082 = vpop.f32.mrf.mxu0
        %v1083 = vadd.f32 0.0, %v1082
        %v1084 = vpop.f32.mrf.mxu0
        %v1085 = vpop.f32.mrf.mxu0
        %v1086 = vpop.f32.mrf.mxu0
        %1087 = vdwg.mxu0
        %v1089 = vsel %vm816, %v1038, 0
        %v1092 = vsel %vm1044, %v813, 0
        %1094 = vmatprep.subr.bf16.mxu0 0
        %1095 = vmatpush1.bf16.msra.mxu0 0
        %1096 = vmatprep.subr.bf16.mxu0 0
        %1097 = vmatpush1.bf16.msra.mxu0 0
        %1098 = vmatprep.subr.bf16.mxu0 0
        %1099 = vmatpush1.bf16.msra.mxu0 0
        %1100 = vmatprep.subr.bf16.mxu0 0
        %1101 = vmatpush1.bf16.msra.mxu0 0
        %1102 = vmatprep.subr.bf16.mxu0 0
        %1103 = vmatpush1.bf16.msra.mxu0 0
        %1104 = vmatprep.subr.bf16.mxu0 0
        %1105 = vmatpush1.bf16.msra.mxu0 0
        %1106 = vmatprep.subr.bf16.mxu0 0
        %1107 = vmatpush1.bf16.msra.mxu0 0
        %1108 = vmatprep.subr.bf16.mxu0 0
        %1109 = vmatpush1.bf16.msra.mxu0 %v1092
        %1110 = vmatprep.subr.bf16.mxu0 0
        %1111 = vmatpush2.bf16.msra.mxu0 0
        %1112 = vmatprep.subr.bf16.mxu0 0
        %1113 = vmatpush2.bf16.msra.mxu0 0
        %1114 = vmatprep.subr.bf16.mxu0 0
        %1115 = vmatpush2.bf16.msra.mxu0 0
        %1116 = vmatprep.subr.bf16.mxu0 0
        %1117 = vmatpush2.bf16.msra.mxu0 0
        %1118 = vmatprep.subr.bf16.mxu0 0
        %1119 = vmatpush2.bf16.msra.mxu0 0
        %1120 = vmatprep.subr.bf16.mxu0 0
        %1121 = vmatpush2.bf16.msra.mxu0 0
        %1122 = vmatprep.subr.bf16.mxu0 0
        %1123 = vmatpush2.bf16.msra.mxu0 0
        %1124 = vmatprep.subr.bf16.mxu0 0
        %1125 = vmatpush2.bf16.msra.mxu0 0
        %1126 = vmatprep.mubr.bf16.mxu0 0
        %1127 = vmatmul.mubr.bf16.gmra.mxu0 %v1089
        %v1128 = vpop.f32.mrf.mxu0
        %v1129 = vadd.f32 0.0, %v1128
        %v1130 = vpop.f32.mrf.mxu0
        %v1131 = vpop.f32.mrf.mxu0
        %v1132 = vpop.f32.mrf.mxu0
        %1133 = vdwg.mxu0
        %v1135 = vsel %vm816, %v1039, 0
        %v1138 = vsel %vm1044, %v814, 0
        %1140 = vmatprep.subr.bf16.mxu0 0
        %1141 = vmatpush1.bf16.msra.mxu0 0
        %1142 = vmatprep.subr.bf16.mxu0 0
        %1143 = vmatpush1.bf16.msra.mxu0 0
        %1144 = vmatprep.subr.bf16.mxu0 0
        %1145 = vmatpush1.bf16.msra.mxu0 0
        %1146 = vmatprep.subr.bf16.mxu0 0
        %1147 = vmatpush1.bf16.msra.mxu0 0
        %1148 = vmatprep.subr.bf16.mxu0 0
        %1149 = vmatpush1.bf16.msra.mxu0 0
        %1150 = vmatprep.subr.bf16.mxu0 0
        %1151 = vmatpush1.bf16.msra.mxu0 0
        %1152 = vmatprep.subr.bf16.mxu0 0
        %1153 = vmatpush1.bf16.msra.mxu0 0
        %1154 = vmatprep.subr.bf16.mxu0 0
        %1155 = vmatpush1.bf16.msra.mxu0 %v1138
        %1156 = vmatprep.subr.bf16.mxu0 0
        %1157 = vmatpush2.bf16.msra.mxu0 0
        %1158 = vmatprep.subr.bf16.mxu0 0
        %1159 = vmatpush2.bf16.msra.mxu0 0
        %1160 = vmatprep.subr.bf16.mxu0 0
        %1161 = vmatpush2.bf16.msra.mxu0 0
        %1162 = vmatprep.subr.bf16.mxu0 0
        %1163 = vmatpush2.bf16.msra.mxu0 0
        %1164 = vmatprep.subr.bf16.mxu0 0
        %1165 = vmatpush2.bf16.msra.mxu0 0
        %1166 = vmatprep.subr.bf16.mxu0 0
        %1167 = vmatpush2.bf16.msra.mxu0 0
        %1168 = vmatprep.subr.bf16.mxu0 0
        %1169 = vmatpush2.bf16.msra.mxu0 0
        %1170 = vmatprep.subr.bf16.mxu0 0
        %1171 = vmatpush2.bf16.msra.mxu0 0
        %1172 = vmatprep.mubr.bf16.mxu0 0
        %1173 = vmatmul.mubr.bf16.gmra.mxu0 %v1135
        %v1174 = vpop.f32.mrf.mxu0
        %v1175 = vadd.f32 0.0, %v1174
        %v1176 = vpop.f32.mrf.mxu0
        %v1177 = vpop.f32.mrf.mxu0
        %v1178 = vpop.f32.mrf.mxu0
        %1179 = vdwg.mxu0
        %v1181 = vsel %vm816, %v1040, 0
        %v1184 = vsel %vm1044, %v815, 0
        %1186 = vmatprep.subr.bf16.mxu0 0
        %1187 = vmatpush1.bf16.msra.mxu0 0
        %1188 = vmatprep.subr.bf16.mxu0 0
        %1189 = vmatpush1.bf16.msra.mxu0 0
        %1190 = vmatprep.subr.bf16.mxu0 0
        %1191 = vmatpush1.bf16.msra.mxu0 0
        %1192 = vmatprep.subr.bf16.mxu0 0
        %1193 = vmatpush1.bf16.msra.mxu0 0
        %1194 = vmatprep.subr.bf16.mxu0 0
        %1195 = vmatpush1.bf16.msra.mxu0 0
        %1196 = vmatprep.subr.bf16.mxu0 0
        %1197 = vmatpush1.bf16.msra.mxu0 0
        %1198 = vmatprep.subr.bf16.mxu0 0
        %1199 = vmatpush1.bf16.msra.mxu0 0
        %1200 = vmatprep.subr.bf16.mxu0 0
        %1201 = vmatpush1.bf16.msra.mxu0 %v1184
        %1202 = vmatprep.subr.bf16.mxu0 0
        %1203 = vmatpush2.bf16.msra.mxu0 0
        %1204 = vmatprep.subr.bf16.mxu0 0
        %1205 = vmatpush2.bf16.msra.mxu0 0
        %1206 = vmatprep.subr.bf16.mxu0 0
        %1207 = vmatpush2.bf16.msra.mxu0 0
        %1208 = vmatprep.subr.bf16.mxu0 0
        %1209 = vmatpush2.bf16.msra.mxu0 0
        %1210 = vmatprep.subr.bf16.mxu0 0
        %1211 = vmatpush2.bf16.msra.mxu0 0
        %1212 = vmatprep.subr.bf16.mxu0 0
        %1213 = vmatpush2.bf16.msra.mxu0 0
        %1214 = vmatprep.subr.bf16.mxu0 0
        %1215 = vmatpush2.bf16.msra.mxu0 0
        %1216 = vmatprep.subr.bf16.mxu0 0
        %1217 = vmatpush2.bf16.msra.mxu0 0
        %1218 = vmatprep.mubr.bf16.mxu0 0
        %1219 = vmatmul.mubr.bf16.gmra.mxu0 %v1181
        %v1220 = vpop.f32.mrf.mxu0
        %v1221 = vadd.f32 0.0, %v1220
        %v1222 = vpop.f32.mrf.mxu0
        %v1223 = vpop.f32.mrf.mxu0
        %v1224 = vpop.f32.mrf.mxu0
        %1225 = vdwg.mxu0
        %v1226 = vrcp.pop %v1027
        %v1227 = vrcp.pop %v1030
        %v1228 = vrcp.pop %v1033
        %v1229 = vrcp.pop %v1036
        %v1230 = vmul.f32 %v1083, %v1226
        %v1231 = vmul.f32 %v1129, %v1227
        %v1232 = vmul.f32 %v1175, %v1228
        %v1233 = vmul.f32 %v1221, %v1229
        %v1234 = vcombine.low %v1230, %v1232
        %v1235 = vcombine.high %v1230, %v1232
        %v1237 = vunpack.c.l.s4 1983009808
        %v1238 = vunpack.c.0.s8 %v1237
        %v1239 = vlaneseq
        %v1240 = vshrl.u32 %v1239, 7
        %v1241 = vsub.s32 %v1238, %v1240
        %v1242 = vrot.slane %v1234, %v1241
        %v1244 = vunpack.c.l.s4 1983009808
        %v1245 = vunpack.c.0.s8 %v1244
        %v1246 = vlaneseq
        %v1247 = vshrl.u32 %v1246, 7
        %v1248 = vsub.s32 %v1245, %v1247
        %v1249 = vrot.slane %v1235, %v1248
        %v1250 = vcombine.low %v1231, %v1233
        %v1251 = vcombine.high %v1231, %v1233
        %v1253 = vunpack.c.l.s4 1983009808
        %v1254 = vunpack.c.0.s8 %v1253
        %v1255 = vlaneseq
        %v1256 = vshrl.u32 %v1255, 7
        %v1257 = vsub.s32 %v1254, %v1256
        %v1258 = vrot.slane %v1250, %v1257
        %v1260 = vunpack.c.l.s4 1983009808
        %v1261 = vunpack.c.0.s8 %v1260
        %v1262 = vlaneseq
        %v1263 = vshrl.u32 %v1262, 7
        %v1264 = vsub.s32 %v1261, %v1263
        %v1265 = vrot.slane %v1251, %v1264
        %v1266 = vcombine.low %v1242, %v1258
        %v1267 = vcombine.high %v1242, %v1258
        %v1269 = vunpack.c.l.s4 1934713408
        %v1270 = vunpack.c.0.s8 %v1269
        %v1271 = vlaneseq
        %v1272 = vshrl.u32 %v1271, 7
        %v1273 = vsub.s32 %v1270, %v1272
        %v1274 = vrot.slane %v1266, %v1273
        %v1276 = vunpack.c.l.s4 1934713408
        %v1277 = vunpack.c.0.s8 %v1276
        %v1278 = vlaneseq
        %v1279 = vshrl.u32 %v1278, 7
        %v1280 = vsub.s32 %v1277, %v1279
        %v1281 = vrot.slane %v1267, %v1280
        %v1282 = vcombine.low %v1249, %v1265
        %v1283 = vcombine.high %v1249, %v1265
        %v1285 = vunpack.c.l.s4 1934713408
        %v1286 = vunpack.c.0.s8 %v1285
        %v1287 = vlaneseq
        %v1288 = vshrl.u32 %v1287, 7
        %v1289 = vsub.s32 %v1286, %v1288
        %v1290 = vrot.slane %v1282, %v1289
        %v1292 = vunpack.c.l.s4 1934713408
        %v1293 = vunpack.c.0.s8 %v1292
        %v1294 = vlaneseq
        %v1295 = vshrl.u32 %v1294, 7
        %v1296 = vsub.s32 %v1293, %v1295
        %v1297 = vrot.slane %v1283, %v1296
        %v1298 = vcombine.high %v1274, 0.0
        %v1299 = vcombine.high %v1281, 0.0
        %v1300 = vcombine.high %v1290, 0.0
        %v1301 = vcombine.high %v1297, 0.0
        %v1302 = vcombine.low %v1274, %v1281
        %v1304 = vunpack.c.l.s4 1983009808
        %v1305 = vunpack.c.0.s8 %v1304
        %v1306 = vlaneseq
        %v1307 = vshrl.u32 %v1306, 7
        %v1308 = vsub.s32 %v1305, %v1307
        %v1309 = vrot.slane %v1302, %v1308
        %v1310 = vcombine.low %v1298, %v1299
        %v1312 = vunpack.c.l.s4 1983009808
        %v1313 = vunpack.c.0.s8 %v1312
        %v1314 = vlaneseq
        %v1315 = vshrl.u32 %v1314, 7
        %v1316 = vsub.s32 %v1313, %v1315
        %v1317 = vrot.slane %v1310, %v1316
        %v1318 = vcombine.low %v1290, %v1297
        %v1320 = vunpack.c.l.s4 1983009808
        %v1321 = vunpack.c.0.s8 %v1320
        %v1322 = vlaneseq
        %v1323 = vshrl.u32 %v1322, 7
        %v1324 = vsub.s32 %v1321, %v1323
        %v1325 = vrot.slane %v1318, %v1324
        %v1326 = vcombine.low %v1300, %v1301
        %v1328 = vunpack.c.l.s4 1983009808
        %v1329 = vunpack.c.0.s8 %v1328
        %v1330 = vlaneseq
        %v1331 = vshrl.u32 %v1330, 7
        %v1332 = vsub.s32 %v1329, %v1331
        %v1333 = vrot.slane %v1326, %v1332
        %v1334 = vcombine.low %v1309, %v1317
        %v1335 = vcombine.high %v1309, %v1317
        %v1337 = vunpack.c.l.s4 1934713408
        %v1338 = vunpack.c.0.s8 %v1337
        %v1339 = vlaneseq
        %v1340 = vshrl.u32 %v1339, 7
        %v1341 = vsub.s32 %v1338, %v1340
        %v1342 = vrot.slane %v1334, %v1341
        %v1344 = vunpack.c.l.s4 1934713408
        %v1345 = vunpack.c.0.s8 %v1344
        %v1346 = vlaneseq
        %v1347 = vshrl.u32 %v1346, 7
        %v1348 = vsub.s32 %v1345, %v1347
        %v1349 = vrot.slane %v1335, %v1348
        %v1350 = vcombine.low %v1325, %v1333
        %v1351 = vcombine.high %v1325, %v1333
        %v1353 = vunpack.c.l.s4 1934713408
        %v1354 = vunpack.c.0.s8 %v1353
        %v1355 = vlaneseq
        %v1356 = vshrl.u32 %v1355, 7
        %v1357 = vsub.s32 %v1354, %v1356
        %v1358 = vrot.slane %v1350, %v1357
        %v1360 = vunpack.c.l.s4 1934713408
        %v1361 = vunpack.c.0.s8 %v1360
        %v1362 = vlaneseq
        %v1363 = vshrl.u32 %v1362, 7
        %v1364 = vsub.s32 %v1361, %v1363
        %v1365 = vrot.slane %v1351, %v1364
        %v1366 = vcombine.low %v1342, %v1358
        %v1367 = vcombine.high %v1342, %v1358
        %v1368 = vcombine.low %v1349, %v1365
        %v1369 = vcombine.high %v1349, %v1365
        %1371 = vrot.lane.b32.xlu0 %v1367, 8
        %v1372 = vpop.permute.xlu0 %1371
        %1375 = vrot.lane.b32.xlu0 %v1368, 16
        %v1376 = vpop.permute.xlu0 %1375
        %1379 = vrot.lane.b32.xlu0 %v1369, 24
        %v1380 = vpop.permute.xlu0 %1379
        %v1382 = vsel %vm816, %v1366, %v1372
        %vm1383 = vcmask 130048
        %v1384 = vsel %vm1383, %v1382, %v1376
        %vm1385 = vcmask 195584
        %v1386 = vsel %vm1385, %v1384, %v1380
        %v1387 = vpack.c.bf16 %v1386, %v1386
        %v1388 = vld [vmem:[#allocation7] sm:$0xf]
        %v1389 = vld [vmem:[#allocation7 + $0x4] sm:$0xf]
        %v1390 = vld [vmem:[#allocation7 + $0x8] sm:$0xf]
        %v1391 = vld [vmem:[#allocation7 + $0xc] sm:$0xf]
        %v1396 = vunpack.c.l.b16 %v1388
        %v1397 = vunpack.c.l.b16 %v1389
        %v1398 = vunpack.c.l.b16 %v1390
        %v1399 = vunpack.c.l.b16 %v1391
        %v1400 = vpack.c.b16 %v1397, %v1396
        %v1401 = vpack.c.b16 %v1399, %v1398
        %v1405 = vsel %vm271, %v1387, 0
        %1407 = vmatprep.subr.bf16.mxu0 0
        %1408 = vmatpush1.bf16.msra.mxu0 0
        %1409 = vmatprep.subr.bf16.mxu0 0
        %1410 = vmatpush1.bf16.msra.mxu0 0
        %1411 = vmatprep.subr.bf16.mxu0 0
        %1412 = vmatpush1.bf16.msra.mxu0 0
        %1413 = vmatprep.subr.bf16.mxu0 0
        %1414 = vmatpush1.bf16.msra.mxu0 0
        %1415 = vmatprep.subr.bf16.mxu0 0
        %1416 = vmatpush1.bf16.msra.mxu0 0
        %1417 = vmatprep.subr.bf16.mxu0 0
        %1418 = vmatpush1.bf16.msra.mxu0 0
        %1419 = vmatprep.subr.bf16.mxu0 0
        %1420 = vmatpush1.bf16.msra.mxu0 %v1401
        %1421 = vmatprep.subr.bf16.mxu0 0
        %1422 = vmatpush1.bf16.msra.mxu0 %v1400
        %1423 = vmatprep.subr.bf16.mxu0 0
        %1424 = vmatpush2.bf16.msra.mxu0 0
        %1425 = vmatprep.subr.bf16.mxu0 0
        %1426 = vmatpush2.bf16.msra.mxu0 0
        %1427 = vmatprep.subr.bf16.mxu0 0
        %1428 = vmatpush2.bf16.msra.mxu0 0
        %1429 = vmatprep.subr.bf16.mxu0 0
        %1430 = vmatpush2.bf16.msra.mxu0 0
        %1431 = vmatprep.subr.bf16.mxu0 0
        %1432 = vmatpush2.bf16.msra.mxu0 0
        %1433 = vmatprep.subr.bf16.mxu0 0
        %1434 = vmatpush2.bf16.msra.mxu0 0
        %1435 = vmatprep.subr.bf16.mxu0 0
        %1436 = vmatpush2.bf16.msra.mxu0 0
        %1437 = vmatprep.subr.bf16.mxu0 0
        %1438 = vmatpush2.bf16.msra.mxu0 0
        %1439 = vmatprep.mubr.bf16.mxu0 0
        %1440 = vmatmul.mubr.bf16.gmra.mxu0 %v1405
        %v1441 = vpop.f32.mrf.mxu0
        %v1442 = vadd.f32 0.0, %v1441
        %v1443 = vpop.f32.mrf.mxu0
        %v1444 = vpop.f32.mrf.mxu0
        %v1445 = vpop.f32.mrf.mxu0
        %1446 = vdwg.mxu0
        %1447 = vst.msk [vmem:[%s268] sm:$0xff] %vm271, %v1442
        %s1448 = sand.u32 %s141, 1
        %s1449 = scalar_lea.sflag [#allocation4], %s1448
        %s1450 = sand.u32 %s141, 1
        %s1451 = smul.addr %s1450, 8
        %s1452 = scalar_lea.vmem [#allocation8], %s1451
        // Predicated region
        $region53: #{tpu_custom_call.1} parent=39 // pred_check
          %p1453 = pneg %p151
        $region54: #{tpu_custom_call.1} parent=39 // pred_check_branch
          %1455 = sbr.rel (%p1453) target = $region56
        $region55: #{tpu_custom_call.1} parent=39 // pred_region
          %s1457 = ssub.s32 128, 128
          %1458 = vsyncadd %s1449, %s1457
          %s1459 = smul.addr %s23, 128
          %s1460 = scalar_lea.hbm %s5, %s1459
          %s1462 = sshll.u32 %s1452, 4
          %s1463 = int_to_ptr.vmem [resolvable:$true] %s1462
          %1465 = dma.vmem_to_hbm [thread:$0]  %s1463, 128, %s1460, %s1449
        $region56: #{tpu_custom_call.1} parent=39 // pred_fallthru
          _
      $region40: #{tpu_custom_call.1} parent=5 // pred_fallthru
        _
      %p1466 = scmp.le.s32.totalorder 2, %s18
      // Predicated region
      $region57: #{tpu_custom_call.1} parent=5 // pred_check
        %p1467 = pneg %p1466
      $region58: #{tpu_custom_call.1} parent=5 // pred_check_branch
        %1469 = sbr.rel (%p1467) target = $region60
      $region59: #{tpu_custom_call.1} parent=5 // pred_region
        %s1470 = ssub.s32 %s18, 2
        // Predicated region
        $region61: #{tpu_custom_call.1} parent=59 // pred_check
          %p1471 = pneg %p157
        $region62: #{tpu_custom_call.1} parent=59 // pred_check_branch
          %1473 = sbr.rel (%p1471) target = $region64
        $region63: #{tpu_custom_call.1} parent=59 // pred_region
          %s1474 = sand.u32 %s142, 1
          %s1475 = scalar_lea.sflag [#allocation4], %s1474
          %s1476 = sand.u32 %s142, 1
          %s1477 = smul.addr %s1476, 8
          %s1478 = scalar_lea.vmem [#allocation8], %s1477
          %1479 = dma.done %s1475, 128
        $region64: #{tpu_custom_call.1} parent=59 // pred_fallthru
          _
      $region60: #{tpu_custom_call.1} parent=5 // pred_fallthru
        _
    $region6: #{tpu_custom_call.1} parent=1 // loop_footer
      %s22 = sadd.s32 1, %s18
    $region7: #{tpu_custom_call.1} parent=1 // loop_footer_branch
      %17 = sbr.rel target = $region3
    $region8: #{tpu_custom_call.1} parent=1 // loop_exit
      _
    %1480 = vsyncpa [#allocation3], 1
    %s1481 = scalar_lea.sflag [#allocation3], 1
    %1482 = vsyncpa %s1481, 1
    %1483 = vsyncpa [#allocation6], 1
    %1484 = vsyncpa [#allocation4], 1
    %s1485 = scalar_lea.sflag [#allocation4], 1
    %1486 = vsyncpa %s1485, 1

</llo_original>
